<compile_context>
chip_gen: v5e
topology: v5e:2x2
jax: 0.10.0
libtpu: 0.0.40
codegen_flags: <defaults>
</compile_context>

<pallas_src>
import functools

import jax
import jax.numpy as jnp
from jax import lax
from jax.experimental import pallas as pl
from jax.experimental.pallas import tpu as pltpu


_LANE = 128
_MAX_TILE_ROWS = 2048


def _round_up(x, m):
    return (x + m - 1) // m * m


def _vmem_budgets():
    """Returns (io_data_budget_bytes, vmem_limit_ceiling_bytes), TPU-gen aware."""
    try:
        cap = int(pltpu.get_tpu_info().vmem_capacity_bytes)
    except Exception:
        cap = 64 << 20                      # conservative: assume v7x-class VMEM
    if cap <= (64 << 20):                   # v7x: 64 MiB per TensorCore
        return 12 << 20, 40 << 20
    return 24 << 20, 64 << 20               # v5e / v6e: 128 MiB


# ----------------------------------------------------------------------------
# Kernels
# ----------------------------------------------------------------------------
def _softmax_ce_kernel(x_ref, t_ref, o_ref):
    """Full class axis in one (tile_rows, C) block."""
    x = x_ref[...].astype(jnp.float32)
    m = jnp.max(x, axis=-1, keepdims=True)
    lse = jnp.log(jnp.sum(jnp.exp(x - m), axis=-1, keepdims=True))
    # (m + lse) - x == -log_softmax(x); avoids keeping `shifted` live to the end.
    o_ref[...] = (((m + lse) - x) * t_ref[...].astype(jnp.float32)).astype(o_ref.dtype)


def _lse_stats_kernel(x_ref, stat_ref, m_ref, l_ref, *, num_classes, class_chunk,
                      ragged):
    """Pass 1 (large C): online logsumexp over class chunks -> per-row m + log l."""
    j = pl.program_id(1)

    @pl.when(j == 0)
    def _():
        m_ref[...] = jnp.full_like(m_ref, -jnp.inf)
        l_ref[...] = jnp.zeros_like(l_ref)

    x = x_ref[...].astype(jnp.float32)
    if ragged:
        # Mask lanes past the true class count (final ragged chunk); cheap VPU ops.
        col = j * class_chunk + lax.broadcasted_iota(jnp.int32, x.shape, 1)
        x = jnp.where(col < num_classes, x, -1e30)

    m_prev = m_ref[...]
    m_new = jnp.maximum(m_prev, jnp.max(x, axis=-1, keepdims=True))
    l_ref[...] = l_ref[...] * jnp.exp(m_prev - m_new) + jnp.sum(
        jnp.exp(x - m_new), axis=-1, keepdims=True)
    m_ref[...] = m_new

    @pl.when(j == pl.num_programs(1) - 1)
    def _():
        stat_ref[...] = m_ref[...] + jnp.log(l_ref[...])


def _ce_from_stats_kernel(x_ref, t_ref, stat_ref, o_ref):
    """Pass 2 (large C): out = (logsumexp_stat - x) * target, pure elementwise."""
    x = x_ref[...].astype(jnp.float32)
    o_ref[...] = ((stat_ref[...] - x) * t_ref[...].astype(jnp.float32)).astype(
        o_ref.dtype)


# ----------------------------------------------------------------------------
# Wrapper
# ----------------------------------------------------------------------------
def softmax_ce_loss(inp, target, *, tile_rows=None, class_chunk=None):
    """Pallas implementation of SoftmaxCELoss.forward(input, target)."""
    assert inp.shape == target.shape
    orig_shape = inp.shape
    C = int(orig_shape[-1])
    out_dtype = jnp.result_type(inp.dtype, target.dtype)

    x2 = inp.reshape(-1, C)
    t2 = target.reshape(-1, C)
    rows = int(x2.shape[0])

    xi = x2.dtype.itemsize
    ti = t2.dtype.itemsize
    oi = jnp.dtype(out_dtype).itemsize

    # Row alignment: f32 packs in 8-row sublane tiles, bf16/fp16 need 16.
    row_align = max(8, 32 // max(1, min(xi, ti, oi)))

    data_budget, vmem_ceiling = _vmem_budgets()

    def _pick_rows(per_elem, c_block, override):
        tr = int(override) if override is not None else (
            data_budget // max(1, per_elem * c_block))
        tr = max(row_align, min(_MAX_TILE_ROWS, tr))
        tr = (tr // row_align) * row_align
        # Keep >= ~4 row tiles so both v7x TensorCores get work (megacore).
        tr = min(tr, max(row_align, _round_up(-(-rows // 4), row_align)))
        tr = min(tr, _round_up(rows, row_align))
        return max(row_align, tr)

    def _vmem_limit(io_bytes, temp_bytes):
        needed = io_bytes + temp_bytes + (2 << 20)
        return int(min(vmem_ceiling, max(32 << 20, needed)))

    # Double-buffered I/O bytes + in-kernel f32 temporaries, per tile element.
    per_elem_single = 2 * (xi + ti + oi) + 3 * 4
    use_chunked = class_chunk is not None or (
        per_elem_single * row_align * C > data_budget)

    if not use_chunked:
        # ---- Single-block class axis ----
        tr = _pick_rows(per_elem_single, C, tile_rows)
        io_bytes = 2 * tr * C * (xi + ti + oi)
        temp_bytes = 3 * tr * C * 4
        out = pl.pallas_call(
            _softmax_ce_kernel,
            out_shape=jax.ShapeDtypeStruct((rows, C), out_dtype),
            grid=(pl.cdiv(rows, tr),),
            in_specs=[
                pl.BlockSpec((tr, C), lambda i: (i, 0)),
                pl.BlockSpec((tr, C), lambda i: (i, 0)),
            ],
            out_specs=pl.BlockSpec((tr, C), lambda i: (i, 0)),
            compiler_params=pltpu.CompilerParams(
                dimension_semantics=("parallel",),
                vmem_limit_bytes=_vmem_limit(io_bytes, temp_bytes),
            ),
        )(x2, t2)
        return out.reshape(orig_shape)

    # ---- Chunked (large-C) path: two passes ----
    c_full = _round_up(C, _LANE)
    if class_chunk is not None:
        chunk = min(c_full, _round_up(int(class_chunk), _LANE))
    else:
        chunk = min(c_full, 8192 if data_budget >= (20 << 20) else 4096)
    nc = pl.cdiv(C, chunk)
    ragged = (C % chunk) != 0

    # Pass 1 streams only x (plus tiny stats), so it affords more rows per tile.
    per_elem_p1 = 2 * xi + 2 * 4
    per_elem_p2 = 2 * (xi + ti + oi) + 2 * 4
    tr1 = _pick_rows(per_elem_p1, chunk, tile_rows)
    tr2 = _pick_rows(per_elem_p2, chunk, tile_rows)

    lse_kernel = functools.partial(
        _lse_stats_kernel, num_classes=C, class_chunk=chunk, ragged=ragged)

    stats = pl.pallas_call(
        lse_kernel,
        out_shape=jax.ShapeDtypeStruct((rows, 1), jnp.float32),
        grid=(pl.cdiv(rows, tr1), nc),
        in_specs=[pl.BlockSpec((tr1, chunk), lambda i, j: (i, j))],
        out_specs=pl.BlockSpec((tr1, 1), lambda i, j: (i, 0)),
        scratch_shapes=[
            pltpu.VMEM((tr1, 1), jnp.float32),   # running max
            pltpu.VMEM((tr1, 1), jnp.float32),   # running sum-exp
        ],
        compiler_params=pltpu.CompilerParams(
            dimension_semantics=("parallel", "arbitrary"),
            vmem_limit_bytes=_vmem_limit(2 * tr1 * chunk * xi,
                                         2 * tr1 * chunk * 4),
        ),
    )(x2)

    out = pl.pallas_call(
        _ce_from_stats_kernel,
        out_shape=jax.ShapeDtypeStruct((rows, C), out_dtype),
        grid=(pl.cdiv(rows, tr2), nc),
        in_specs=[
            pl.BlockSpec((tr2, chunk), lambda i, j: (i, j)),
            pl.BlockSpec((tr2, chunk), lambda i, j: (i, j)),
            pl.BlockSpec((tr2, 1), lambda i, j: (i, 0)),
        ],
        out_specs=pl.BlockSpec((tr2, chunk), lambda i, j: (i, j)),
        compiler_params=pltpu.CompilerParams(
            dimension_semantics=("parallel", "parallel"),
            vmem_limit_bytes=_vmem_limit(2 * tr2 * chunk * (xi + ti + oi),
                                         2 * tr2 * chunk * 4),
        ),
    )(x2, t2, stats)
    return out.reshape(orig_shape)


# ----------------------------------------------------------------------------
# Self-test
# ----------------------------------------------------------------------------
def _reference(x, t):
    xf = x.astype(jnp.float32)
    tf = t.astype(jnp.float32)
    return -1.0 * jax.nn.log_softmax(xf, axis=-1) * tf


if __name__ == "__main__":
    key = jax.random.PRNGKey(0)
    k1, k2, k3, k4 = jax.random.split(key, 4)

    # --- Test 1: small f32, single-block class axis -------------------------
    B, S, C = 2, 8, 128
    x = jax.random.normal(k1, (B, S, C), dtype=jnp.float32)
    target = jax.nn.softmax(jax.random.normal(k2, (B, S, C), dtype=jnp.float32), axis=-1)

    out = softmax_ce_loss(x, target)
    jax.block_until_ready(out)
    ref = _reference(x, target)
    assert out.shape == x.shape
    assert jnp.allclose(out, ref, atol=1e-5, rtol=1e-5), "f32 full-C path mismatch"

    # --- Test 2: chunked path, ragged rows AND ragged final class chunk -----
    B2, S2, C2 = 2, 7, 300
    x2 = jax.random.normal(k3, (B2, S2, C2), dtype=jnp.float32)
    t2 = jax.nn.softmax(jax.random.normal(k4, (B2, S2, C2), dtype=jnp.float32), axis=-1)

    out2 = softmax_ce_loss(x2, t2, class_chunk=128)   # force the chunked kernels
    jax.block_until_ready(out2)
    ref2 = _reference(x2, t2)
    assert out2.shape == x2.shape
    assert jnp.allclose(out2, ref2, atol=1e-4, rtol=1e-5), "chunked path mismatch"

    # --- Test 3: bf16 I/O end-to-end (f32 reduction internally) -------------
    xb = x.astype(jnp.bfloat16)
    tb = target.astype(jnp.bfloat16)
    out3 = softmax_ce_loss(xb, tb)
    jax.block_until_ready(out3)
    ref3 = _reference(xb, tb).astype(jnp.bfloat16)
    assert out3.dtype == jnp.bfloat16
    assert jnp.allclose(out3.astype(jnp.float32), ref3.astype(jnp.float32),
                        atol=2e-2, rtol=2e-2), "bf16 path mismatch"

    print("KERNEL_OK")
</pallas_src>

<mosaic_0001>
module attributes {stable_mosaic.version = 11 : i64} {
  func.func @_softmax_ce_kernel(%arg0: i32, %arg1: memref<8x128xf32, #tpu.memory_space<vmem>>, %arg2: memref<8x128xf32, #tpu.memory_space<vmem>>, %arg3: memref<8x128xf32, #tpu.memory_space<vmem>>) attributes {dimension_semantics = [#tpu.dimension_semantics<parallel>], iteration_bounds = array<i64: 2>, scalar_prefetch = 0 : i64, scratch_operands = 0 : i64, tpu.core_type = #tpu.core_type<tc>, window_params = [{transform_indices = @transform_0, window_bounds = array<i64: 8, 128>}, {transform_indices = @transform_1, window_bounds = array<i64: 8, 128>}, {transform_indices = @transform_2, window_bounds = array<i64: 8, 128>}]} {
    %c0 = arith.constant 0 : index
    %c0_0 = arith.constant 0 : index
    %0 = vector.load %arg1[%c0, %c0_0] : memref<8x128xf32, #tpu.memory_space<vmem>>, vector<8x128xf32>
    %cst = arith.constant dense<0xFF800000> : vector<8xf32>
    %1 = vector.multi_reduction <maximumf>, %0, %cst [1] : vector<8x128xf32> to vector<8xf32>
    %2 = vector.shape_cast %1 : vector<8xf32> to vector<8x1xf32>
    %3 = vector.broadcast %2 : vector<8x1xf32> to vector<8x128xf32>
    %4 = arith.subf %0, %3 : vector<8x128xf32>
    %5 = math.exp %4 : vector<8x128xf32>
    %cst_1 = arith.constant dense<0.000000e+00> : vector<8xf32>
    %6 = vector.multi_reduction <add>, %5, %cst_1 [1] : vector<8x128xf32> to vector<8xf32>
    %7 = vector.shape_cast %6 : vector<8xf32> to vector<8x1xf32>
    %8 = math.log %7 : vector<8x1xf32>
    %9 = arith.addf %2, %8 : vector<8x1xf32>
    %10 = vector.broadcast %9 : vector<8x1xf32> to vector<8x128xf32>
    %11 = arith.subf %10, %0 : vector<8x128xf32>
    %c0_2 = arith.constant 0 : index
    %c0_3 = arith.constant 0 : index
    %12 = vector.load %arg2[%c0_2, %c0_3] : memref<8x128xf32, #tpu.memory_space<vmem>>, vector<8x128xf32>
    %13 = arith.mulf %11, %12 : vector<8x128xf32>
    %c0_4 = arith.constant 0 : index
    %c0_5 = arith.constant 0 : index
    %14 = vector.load %arg3[%c0_4, %c0_5] : memref<8x128xf32, #tpu.memory_space<vmem>>, vector<8x128xf32>
    tpu.vector_store %arg3[%c0_4, %c0_5], %13 {strides = array<i32>} : memref<8x128xf32, #tpu.memory_space<vmem>>, vector<8x128xf32>,
    return
  }
  func.func @transform_0(%arg0: i32) -> (i32, i32) {
    %c0_i32 = arith.constant 0 : i32
    %c0_i32_0 = arith.constant 0 : i32
    return %arg0, %c0_i32 : i32, i32
  }
  func.func @transform_1(%arg0: i32) -> (i32, i32) {
    %c0_i32 = arith.constant 0 : i32
    %c0_i32_0 = arith.constant 0 : i32
    return %arg0, %c0_i32 : i32, i32
  }
  func.func @transform_2(%arg0: i32) -> (i32, i32) {
    %c0_i32 = arith.constant 0 : i32
    %c0_i32_0 = arith.constant 0 : i32
    return %arg0, %c0_i32 : i32, i32
  }
}

</mosaic_0001>

<llo_original>
// kernel: tpu_custom_call.1
$region0: #{tpu_custom_call.1}
  #allocation0 [shape = 'u32[]', space=smem, size = 0x4, offset = 0x4, fixed_abs, tag = 'smem constant byte address 0x4 - core index']
  #allocation1 [shape = 'u32[72,128]{1,0:T(1,128)}', space=vmem, size = 0x9000, scoped, tag = 'internal scratch']
  %s0 = inlined_call_operand.hbm [shape: f32[16,128], index: 0, kind: input, shape index: {}]
  %s1 = inlined_call_operand.hbm [shape: f32[16,128], index: 1, kind: input, shape index: {}]
  %s2 = inlined_call_operand.hbm [shape: f32[16,128], index: 2, kind: output, shape index: {}]
  %s3 = sld [smem:[#allocation0]]
  $region49: #{tpu_custom_call.1} parent=0
    _
  %s5 = ssub.s32 1, %s3
  %s6 = scalar_select 0, %s5, %s3
  $region1: #{tpu_custom_call.1} parent=0
    #allocation2 [shape = 'u8[8192]{0}', space=vmem, size = 0x2000, scoped, tag = 'input window, operand 0']
    #allocation3 [shape = 's32[2]{0}', space=sflag, size = 0x8, scoped, tag = 'scoped memory for tpu_custom_call.1']
    #allocation4 [shape = 's32[2]{0}', space=sflag, size = 0x8, scoped, tag = 'scoped memory for tpu_custom_call.1']
    #allocation5 [shape = 'u8[8192]{0}', space=vmem, size = 0x2000, scoped, tag = 'input window, operand 1']
    #allocation6 [shape = 's32[2]{0}', space=sflag, size = 0x8, scoped, tag = 'scoped memory for tpu_custom_call.1']
    #allocation7 [shape = 'u8[8192]{0}', space=vmem, size = 0x2000, scoped, tag = 'output window, operand 0']
    %7 = vsyncpa [#allocation3], 0
    %s8 = scalar_lea.sflag [#allocation3], 1
    %9 = vsyncpa %s8, 0
    %10 = vsyncpa [#allocation6], 0
    %s11 = scalar_lea.sflag [#allocation6], 1
    %12 = vsyncpa %s11, 0
    %13 = vsyncpa [#allocation4], 0
    %s14 = scalar_lea.sflag [#allocation4], 1
    %15 = vsyncpa %s14, 0
    loop: start=0, step=1, limit=4
    $region2: #{tpu_custom_call.1} parent=1 // loop_pre_header
      _
    $region3: #{tpu_custom_call.1} parent=1 // loop_header
      %s17 = sphi 0, %s21
      %p18 = scmp.ge.s32.totalorder %s17, 4
      %s27 = sphi 0, %s29
      %s30 = sphi 0, %s27
      %s31 = sphi 0, %s30
      %s47 = sphi 0, %s31
      %s53 = sphi 0, %s55
      %s56 = sphi 0, %s53
      %s57 = sphi 0, %s56
      %s73 = sphi 0, %s57
      %s79 = sphi 0, %s81
      %s82 = sphi 0, %s79
      %s83 = sphi 0, %s82
      %s99 = sphi 0, %s83
    $region4: #{tpu_custom_call.1} parent=1 // loop_header_branch
      %20 = sbr.rel (%p18) target = $region8
    $region5: #{tpu_custom_call.1} parent=1 // loop_body
      %s22 = ssub.s32 %s17, 1
      %s23 = ssub.s32 %s17, 2
      %s24 = sadd.s32 %s17, 1
      %s25 = ssub.s32 %s17, %s24
      %p26 = scmp.eq.s32.totalorder %s25, 0
      %s28 = sadd.s32 %s27, 1
      %s29 = scalar_select %p26, %s27, %s28
      %p32 = pneg %p26
      %p33 = scmp.eq.s32.totalorder %s17, 1
      %p34 = por %p32, %p33
      %p35 = scmp.ne.s32.totalorder %s27, %s30
      %p36 = scmp.eq.s32.totalorder %s17, 0
      %p37 = por %p35, %p36
      %p38 = scmp.ne.s32.totalorder %s27, %s30
      %p39 = scmp.eq.s32.totalorder %s22, 1
      %p40 = por %p38, %p39
      %p41 = scmp.ne.s32.totalorder %s30, %s31
      %p42 = scmp.eq.s32.totalorder %s22, 0
      %p43 = por %p41, %p42
      %p44 = scmp.ne.s32.totalorder %s30, %s31
      %p45 = scmp.eq.s32.totalorder %s23, 1
      %p46 = por %p44, %p45
      %p48 = scmp.ne.s32.totalorder %s31, %s47
      %p49 = scmp.eq.s32.totalorder %s23, 0
      %p50 = por %p48, %p49
      %s51 = ssub.s32 %s17, %s24
      %p52 = scmp.eq.s32.totalorder %s51, 0
      %s54 = sadd.s32 %s53, 1
      %s55 = scalar_select %p52, %s53, %s54
      %p58 = pneg %p52
      %p59 = scmp.eq.s32.totalorder %s17, 1
      %p60 = por %p58, %p59
      %p61 = scmp.ne.s32.totalorder %s53, %s56
      %p62 = scmp.eq.s32.totalorder %s17, 0
      %p63 = por %p61, %p62
      %p64 = scmp.ne.s32.totalorder %s53, %s56
      %p65 = scmp.eq.s32.totalorder %s22, 1
      %p66 = por %p64, %p65
      %p67 = scmp.ne.s32.totalorder %s56, %s57
      %p68 = scmp.eq.s32.totalorder %s22, 0
      %p69 = por %p67, %p68
      %p70 = scmp.ne.s32.totalorder %s56, %s57
      %p71 = scmp.eq.s32.totalorder %s23, 1
      %p72 = por %p70, %p71
      %p74 = scmp.ne.s32.totalorder %s57, %s73
      %p75 = scmp.eq.s32.totalorder %s23, 0
      %p76 = por %p74, %p75
      %s77 = ssub.s32 %s17, %s24
      %p78 = scmp.eq.s32.totalorder %s77, 0
      %s80 = sadd.s32 %s79, 1
      %s81 = scalar_select %p78, %s79, %s80
      %p84 = pneg %p78
      %p85 = scmp.eq.s32.totalorder %s17, 1
      %p86 = por %p84, %p85
      %p87 = scmp.ne.s32.totalorder %s79, %s82
      %p88 = scmp.eq.s32.totalorder %s17, 0
      %p89 = por %p87, %p88
      %p90 = scmp.ne.s32.totalorder %s79, %s82
      %p91 = scmp.eq.s32.totalorder %s22, 1
      %p92 = por %p90, %p91
      %p93 = scmp.ne.s32.totalorder %s82, %s83
      %p94 = scmp.eq.s32.totalorder %s22, 0
      %p95 = por %p93, %p94
      %p96 = scmp.ne.s32.totalorder %s82, %s83
      %p97 = scmp.eq.s32.totalorder %s23, 1
      %p98 = por %p96, %p97
      %p100 = scmp.ne.s32.totalorder %s83, %s99
      %p101 = scmp.eq.s32.totalorder %s23, 0
      %p102 = por %p100, %p101
      %p103 = scmp.le.s32.totalorder 1, %s17
      %p104 = scmp.lt.s32.totalorder %s17, 3
      %p105 = pnand %p103, %p104
      %p106 = pneg %p105
      // Predicated region
      $region9: #{tpu_custom_call.1} parent=5 // pred_check
        _
      $region10: #{tpu_custom_call.1} parent=5 // pred_check_branch
        %108 = sbr.rel (%p105) target = $region12
      $region11: #{tpu_custom_call.1} parent=5 // pred_region
        %s109 = ssub.s32 %s17, 1
      $region12: #{tpu_custom_call.1} parent=5 // pred_fallthru
        _
      %p110 = scmp.lt.s32.totalorder %s17, 2
      // Predicated region
      $region13: #{tpu_custom_call.1} parent=5 // pred_check
        %p111 = pneg %p110
      $region14: #{tpu_custom_call.1} parent=5 // pred_check_branch
        %113 = sbr.rel (%p111) target = $region16
      $region15: #{tpu_custom_call.1} parent=5 // pred_region
        // Predicated region
        $region17: #{tpu_custom_call.1} parent=15 // pred_check
          %p114 = pneg %p37
        $region18: #{tpu_custom_call.1} parent=15 // pred_check_branch
          %116 = sbr.rel (%p114) target = $region20
        $region19: #{tpu_custom_call.1} parent=15 // pred_region
          %s117 = sand.u32 %s27, 1
          %s118 = scalar_lea.sflag [#allocation3], %s117
          %s119 = sand.u32 %s27, 1
          %s120 = smul.addr %s119, 8
          %s121 = scalar_lea.vmem [#allocation2], %s120
          %123 = vsyncadd %s118, 0
          %s124 = smul.addr %s17, 8
          %s125 = scalar_lea.hbm %s0, %s124
          %s127 = sshll.u32 %s125, 4
          %s128 = int_to_ptr.hbm [resolvable:$true] %s127
          %s129 = sshll.u32 %s121, 4
          %s130 = int_to_ptr.vmem [resolvable:$true] %s129
          %132 = dma.hbm_to_vmem [thread:$0]  %s128, 128, %s130, %s118
        $region20: #{tpu_custom_call.1} parent=15 // pred_fallthru
          _
        // Predicated region
        $region21: #{tpu_custom_call.1} parent=15 // pred_check
          %p133 = pneg %p63
        $region22: #{tpu_custom_call.1} parent=15 // pred_check_branch
          %135 = sbr.rel (%p133) target = $region24
        $region23: #{tpu_custom_call.1} parent=15 // pred_region
          %s136 = sand.u32 %s53, 1
          %s137 = scalar_lea.sflag [#allocation6], %s136
          %s138 = sand.u32 %s53, 1
          %s139 = smul.addr %s138, 8
          %s140 = scalar_lea.vmem [#allocation5], %s139
          %142 = vsyncadd %s137, 0
          %s143 = smul.addr %s17, 8
          %s144 = scalar_lea.hbm %s1, %s143
          %s146 = sshll.u32 %s144, 4
          %s147 = int_to_ptr.hbm [resolvable:$true] %s146
          %s148 = sshll.u32 %s140, 4
          %s149 = int_to_ptr.vmem [resolvable:$true] %s148
          %151 = dma.hbm_to_vmem [thread:$0]  %s147, 128, %s149, %s137
        $region24: #{tpu_custom_call.1} parent=15 // pred_fallthru
          _
      $region16: #{tpu_custom_call.1} parent=5 // pred_fallthru
        _
      %p152 = scmp.le.s32.totalorder 1, %s17
      %p153 = scmp.lt.s32.totalorder %s17, 3
      %p154 = pnand %p152, %p153
      %p155 = pneg %p154
      // Predicated region
      $region25: #{tpu_custom_call.1} parent=5 // pred_check
        _
      $region26: #{tpu_custom_call.1} parent=5 // pred_check_branch
        %157 = sbr.rel (%p154) target = $region28
      $region27: #{tpu_custom_call.1} parent=5 // pred_region
        %s158 = ssub.s32 %s17, 1
        %s159 = sand.u32 %s30, 1
        %s160 = scalar_lea.sflag [#allocation3], %s159
        %s161 = sand.u32 %s30, 1
        %s162 = smul.addr %s161, 8
        %s163 = scalar_lea.vmem [#allocation2], %s162
        // Predicated region
        $region29: #{tpu_custom_call.1} parent=27 // pred_check
          %p164 = pneg %p43
        $region30: #{tpu_custom_call.1} parent=27 // pred_check_branch
          %166 = sbr.rel (%p164) target = $region32
        $region31: #{tpu_custom_call.1} parent=27 // pred_region
          %168 = dma.done %s160, 128
        $region32: #{tpu_custom_call.1} parent=27 // pred_fallthru
          _
        %s169 = sand.u32 %s56, 1
        %s170 = scalar_lea.sflag [#allocation6], %s169
        %s171 = sand.u32 %s56, 1
        %s172 = smul.addr %s171, 8
        %s173 = scalar_lea.vmem [#allocation5], %s172
        // Predicated region
        $region33: #{tpu_custom_call.1} parent=27 // pred_check
          %p174 = pneg %p69
        $region34: #{tpu_custom_call.1} parent=27 // pred_check_branch
          %176 = sbr.rel (%p174) target = $region36
        $region35: #{tpu_custom_call.1} parent=27 // pred_region
          %178 = dma.done %s170, 128
        $region36: #{tpu_custom_call.1} parent=27 // pred_fallthru
          _
        %s179 = sand.u32 %s30, 1
        %s180 = scalar_lea.sflag [#allocation3], %s179
        %s181 = sand.u32 %s30, 1
        %s182 = smul.addr %s181, 8
        %s183 = scalar_lea.vmem [#allocation2], %s182
        %p184 = pneg %p43
        %p185 = pneg %p40
        %s186 = sand.u32 %s56, 1
        %s187 = scalar_lea.sflag [#allocation6], %s186
        %s188 = sand.u32 %s56, 1
        %s189 = smul.addr %s188, 8
        %s190 = scalar_lea.vmem [#allocation5], %s189
        %p191 = pneg %p69
        %p192 = pneg %p66
        %p193 = pneg %p95
        %p194 = pneg %p92
        %s195 = sand.u32 %s82, 1
        %s196 = scalar_lea.sflag [#allocation4], %s195
        %s197 = sand.u32 %s82, 1
        %s198 = smul.addr %s197, 8
        %s199 = scalar_lea.vmem [#allocation7], %s198
        %v200 = vld [vmem:[%s163] sm:$0xff]
        %201 = vmax.xlane.f32.xlu0 %v200
        %v202 = vpop.xlane.xlu0 %201
        %v203 = vsub.f32 %v200, %v202
        %v204 = vmul.f32 %v203, 1.442695
        %v205 = vpow.pop %v204
        %206 = vadd.xlane.f32.xlu0 %v205
        %v207 = vpop.xlane.xlu0 %206
        %v208 = vlog2.pop %v207
        %v209 = vmul.f32 %v208, 0.6931472
        %v210 = vadd.f32 %v202, %v209
        %v211 = vsub.f32 %v210, %v200
        %v212 = vld [vmem:[%s173] sm:$0xff]
        %v213 = vmul.f32 %v211, %v212
        %214 = vst [vmem:[%s199] sm:$0xff] %v213
        %s215 = sand.u32 %s82, 1
        %s216 = scalar_lea.sflag [#allocation4], %s215
        %s217 = sand.u32 %s82, 1
        %s218 = smul.addr %s217, 8
        %s219 = scalar_lea.vmem [#allocation7], %s218
        // Predicated region
        $region37: #{tpu_custom_call.1} parent=27 // pred_check
          %p220 = pneg %p92
        $region38: #{tpu_custom_call.1} parent=27 // pred_check_branch
          %222 = sbr.rel (%p220) target = $region40
        $region39: #{tpu_custom_call.1} parent=27 // pred_region
          %224 = vsyncadd %s216, 0
          %s225 = smul.addr %s22, 8
          %s226 = scalar_lea.hbm %s2, %s225
          %s228 = sshll.u32 %s219, 4
          %s229 = int_to_ptr.vmem [resolvable:$true] %s228
          %s230 = sshll.u32 %s226, 4
          %s231 = int_to_ptr.hbm [resolvable:$true] %s230
          %233 = dma.vmem_to_hbm [thread:$0]  %s229, 128, %s231, %s216
        $region40: #{tpu_custom_call.1} parent=27 // pred_fallthru
          _
      $region28: #{tpu_custom_call.1} parent=5 // pred_fallthru
        _
      %p234 = scmp.le.s32.totalorder 2, %s17
      // Predicated region
      $region41: #{tpu_custom_call.1} parent=5 // pred_check
        %p235 = pneg %p234
      $region42: #{tpu_custom_call.1} parent=5 // pred_check_branch
        %237 = sbr.rel (%p235) target = $region44
      $region43: #{tpu_custom_call.1} parent=5 // pred_region
        %s238 = ssub.s32 %s17, 2
        // Predicated region
        $region45: #{tpu_custom_call.1} parent=43 // pred_check
          %p239 = pneg %p98
        $region46: #{tpu_custom_call.1} parent=43 // pred_check_branch
          %241 = sbr.rel (%p239) target = $region48
        $region47: #{tpu_custom_call.1} parent=43 // pred_region
          %s242 = sand.u32 %s83, 1
          %s243 = scalar_lea.sflag [#allocation4], %s242
          %s244 = sand.u32 %s83, 1
          %s245 = smul.addr %s244, 8
          %s246 = scalar_lea.vmem [#allocation7], %s245
          %248 = dma.done %s243, 128
        $region48: #{tpu_custom_call.1} parent=43 // pred_fallthru
          _
      $region44: #{tpu_custom_call.1} parent=5 // pred_fallthru
        _
    $region6: #{tpu_custom_call.1} parent=1 // loop_footer
      %s21 = sadd.s32 1, %s17
    $region7: #{tpu_custom_call.1} parent=1 // loop_footer_branch
      %16 = sbr.rel target = $region3
    $region8: #{tpu_custom_call.1} parent=1 // loop_exit
      _
    %249 = vsyncpa [#allocation3], 1
    %s250 = scalar_lea.sflag [#allocation3], 1
    %251 = vsyncpa %s250, 1
    %252 = vsyncpa [#allocation6], 1
    %s253 = scalar_lea.sflag [#allocation6], 1
    %254 = vsyncpa %s253, 1
    %255 = vsyncpa [#allocation4], 1
    %s256 = scalar_lea.sflag [#allocation4], 1
    %257 = vsyncpa %s256, 1

</llo_original>
